<compile_context>
chip_gen: v6e
topology: v6e:2x2x1
jax: 0.10.0
libtpu: 0.0.40
codegen_flags: <defaults>
</compile_context>

<pallas_src>
import functools

import jax
import jax.numpy as jnp
from jax import lax
from jax.experimental import pallas as pl
from jax.experimental.pallas import tpu as pltpu


def _elu_plus_one(x):
    # torch.nn.functional.elu(x) + 1 (alpha = 1), computed in x.dtype.
    one = jnp.asarray(1.0, dtype=x.dtype)
    return jnp.where(x > 0, x + one, jnp.exp(x))


def _tpu_kind():
    try:
        return jax.devices()[0].device_kind.lower()
    except Exception:
        return ""


def _pick_head_group(h, d):
    """Smallest divisor hg of h with hg*d a multiple of 128 (else all heads)."""
    for hg in range(1, h + 1):
        if h % hg == 0 and (hg * d) % 128 == 0:
            return hg
    return h


def _pick_tile(dim, target, multiple):
    """Largest divisor of dim that is <= target and a multiple of `multiple`."""
    for t in range(min(dim, target), 0, -1):
        if dim % t == 0 and t % multiple == 0:
            return t
    return dim  # full dim always satisfies the Mosaic block constraint


def _kv_reduce_kernel(mask_ref, k_ref, v_ref, kv_ref, ksum_ref,
                      kv_acc, ksum_acc, *, feat_dtype, mxu_dtype):
    """Pass 1: kv[n,g] = mask * sum_s phi(k)_s^T v_s ;  ksum[n,g] = sum_s phi(k)_s."""
    s = pl.program_id(2)
    n_s = pl.num_programs(2)

    @pl.when(s == 0)
    def _init():
        kv_acc[...] = jnp.zeros_like(kv_acc)
        ksum_acc[...] = jnp.zeros_like(ksum_acc)

    kf = _elu_plus_one(k_ref[0].astype(feat_dtype))               # [St, F]
    v = v_ref[0]                                                  # [St, F]
    kv_acc[...] += lax.dot_general(
        kf.astype(mxu_dtype), v.astype(mxu_dtype),
        dimension_numbers=(((0,), (0,)), ((), ())),
        preferred_element_type=jnp.float32)                       # [F, F]
    ksum_acc[...] += jnp.sum(kf, axis=0, keepdims=True,
                             dtype=jnp.float32)                   # [1, F]

    @pl.when(s == n_s - 1)
    def _finalize():
        # Per-head structure: zero the cross-head blocks of the packed KV once
        # per (n, head-group) here instead of once per L tile in pass 2.
        kv_ref[0, 0] = (kv_acc[...] * mask_ref[...].astype(jnp.float32)
                        ).astype(kv_ref.dtype)
        ksum_ref[0, 0] = ksum_acc[...].astype(ksum_ref.dtype)


def _apply_q_kernel(mask_ref, kv_ref, ksum_ref, q_ref, o_ref, *,
                    eps, feat_dtype, mxu_dtype):
    """Pass 2: out = (phi(q) @ KV) / (per-head sum of phi(q) * ksum + eps)."""
    qf = _elu_plus_one(q_ref[0].astype(feat_dtype))               # [Lt, F]
    num = jnp.dot(qf.astype(mxu_dtype), kv_ref[0, 0].astype(mxu_dtype),
                  preferred_element_type=jnp.float32)             # [Lt, F]
    # Per-head denominator via MXU against the block-diagonal ones mask
    # (avoids an in-lane segmented reduce).
    qz = qf.astype(jnp.float32) * ksum_ref[0, 0].astype(jnp.float32)
    den = jnp.dot(qz.astype(mxu_dtype), mask_ref[...],
                  preferred_element_type=jnp.float32)             # [Lt, F]
    out = num * pl.reciprocal(den + eps, approx=False)
    o_ref[0] = out.astype(o_ref.dtype)


def linear_attention(queries, keys, values, eps=1e-6):
    """queries: [N, L, H, D], keys/values: [N, S, H, D] -> [N, L, H, D]."""
    # TODO(synk): q_mask / kv_mask (optional in the PyTorch module) are not
    # wired through; only the mask-free path is implemented.
    N, L, H, D = queries.shape
    S = keys.shape[1]
    dtype = queries.dtype

    hg = _pick_head_group(H, D)      # heads packed per lane group
    G = H // hg                      # head groups (grid axis)
    F = hg * D                       # packed feature width (lane axis)

    # Free reshapes only (merge trailing dims) — no HBM transpose passes.
    q = queries.reshape(N, L, H * D)
    k = keys.reshape(N, S, H * D)
    v = values.reshape(N, S, H * D)

    kind = _tpu_kind()
    is_v7 = "v7" in kind
    bf16_vpu = ("v6" in kind) or ("v7" in kind)

    mxu_dtype = jnp.bfloat16 if dtype == jnp.bfloat16 else jnp.float32
    # Feature map (ELU+1) dtype: native bf16 where the VPU/EUP support it.
    feat_dtype = jnp.bfloat16 if (dtype == jnp.bfloat16 and bf16_vpu) else jnp.float32

    itemsize = jnp.dtype(dtype).itemsize
    sublane = max(8, 32 // itemsize)          # 8 for f32, 16 for bf16
    block_target = (2 if is_v7 else 6) * 1024 * 1024
    row_target = max(sublane, min(4096, block_target // max(1, F * itemsize)))
    Lt = _pick_tile(L, row_target, sublane)
    St = _pick_tile(S, row_target, sublane)
    nL = L // Lt
    nS = S // St

    vmem_limit = (48 if is_v7 else 96) * 1024 * 1024

    # Block-diagonal per-head ones mask over the packed lane axis (built once).
    rows = jnp.arange(F, dtype=jnp.int32)
    mask = (rows[:, None] // D == rows[None, :] // D).astype(mxu_dtype)   # [F, F]

    # ---- Pass 1: reduce K/V over S into per-(n, head-group) KV and k_sum. ----
    kv, ksum = pl.pallas_call(
        functools.partial(_kv_reduce_kernel,
                          feat_dtype=feat_dtype, mxu_dtype=mxu_dtype),
        out_shape=(jax.ShapeDtypeStruct((N, G, F, F), jnp.float32),
                   jax.ShapeDtypeStruct((N, G, 1, F), jnp.float32)),
        grid=(N, G, nS),
        in_specs=[
            pl.BlockSpec((F, F), lambda n, g, s: (0, 0)),
            pl.BlockSpec((1, St, F), lambda n, g, s: (n, s, g)),
            pl.BlockSpec((1, St, F), lambda n, g, s: (n, s, g)),
        ],
        out_specs=(
            pl.BlockSpec((1, 1, F, F), lambda n, g, s: (n, g, 0, 0)),
            pl.BlockSpec((1, 1, 1, F), lambda n, g, s: (n, g, 0, 0)),
        ),
        scratch_shapes=[
            pltpu.VMEM((F, F), jnp.float32),   # KV accumulator
            pltpu.VMEM((1, F), jnp.float32),   # sum_s phi(K) accumulator
        ],
        compiler_params=pltpu.CompilerParams(
            dimension_semantics=("parallel", "parallel", "arbitrary"),
            vmem_limit_bytes=vmem_limit),
    )(mask, k, v)

    # ---- Pass 2: apply KV / k_sum to Q tiles. ----
    out = pl.pallas_call(
        functools.partial(_apply_q_kernel, eps=float(eps),
                          feat_dtype=feat_dtype, mxu_dtype=mxu_dtype),
        out_shape=jax.ShapeDtypeStruct((N, L, H * D), dtype),
        grid=(N, G, nL),
        in_specs=[
            pl.BlockSpec((F, F), lambda n, g, l: (0, 0)),
            pl.BlockSpec((1, 1, F, F), lambda n, g, l: (n, g, 0, 0)),
            pl.BlockSpec((1, 1, 1, F), lambda n, g, l: (n, g, 0, 0)),
            pl.BlockSpec((1, Lt, F), lambda n, g, l: (n, l, g)),
        ],
        out_specs=pl.BlockSpec((1, Lt, F), lambda n, g, l: (n, l, g)),
        compiler_params=pltpu.CompilerParams(
            dimension_semantics=("parallel", "parallel", "parallel"),
            vmem_limit_bytes=vmem_limit),
    )(mask, kv, ksum, q)

    return out.reshape(N, L, H, D)


def _reference(queries, keys, values, eps=1e-6):
    # Mirrors the PyTorch module semantics exactly (including v_length scaling).
    Q = jnp.where(queries > 0, queries + 1.0, jnp.exp(queries)).astype(jnp.float32)
    K = jnp.where(keys > 0, keys + 1.0, jnp.exp(keys)).astype(jnp.float32)
    v = values.astype(jnp.float32)
    v_length = v.shape[1]
    v = v / v_length
    KV = jnp.einsum('nshd,nshv->nhdv', K, v)
    Z = 1.0 / (jnp.einsum('nlhd,nhd->nlh', Q, K.sum(axis=1)) + eps)
    return jnp.einsum('nlhd,nhdv,nlh->nlhv', Q, KV, Z) * v_length


if __name__ == "__main__":
    N, L, S, H, D = 2, 16, 8, 4, 32
    key = jax.random.PRNGKey(0)
    kq, kk, kv = jax.random.split(key, 3)
    queries = jax.random.normal(kq, (N, L, H, D), dtype=jnp.float32)
    keys = jax.random.normal(kk, (N, S, H, D), dtype=jnp.float32)
    values = jax.random.normal(kv, (N, S, H, D), dtype=jnp.float32)

    out = linear_attention(queries, keys, values)
    out = jax.block_until_ready(out)

    ref = _reference(queries, keys, values)
    assert out.shape == (N, L, H, D)
    assert jnp.allclose(out, ref, atol=1e-4, rtol=1e-4), (
        float(jnp.max(jnp.abs(out - ref))))

    print("KERNEL_OK")
</pallas_src>

<mosaic_0001>
module attributes {stable_mosaic.version = 11 : i64} {
  func.func @_kv_reduce_kernel(%arg0: i32, %arg1: i32, %arg2: i32, %arg3: memref<128x128xf32, #tpu.memory_space<vmem>>, %arg4: memref<1x8x128xf32, #tpu.memory_space<vmem>>, %arg5: memref<1x8x128xf32, #tpu.memory_space<vmem>>, %arg6: memref<1x1x128x128xf32, #tpu.memory_space<vmem>>, %arg7: memref<1x1x1x128xf32, #tpu.memory_space<vmem>>, %arg8: memref<128x128xf32, #tpu.memory_space<vmem>>, %arg9: memref<1x128xf32, #tpu.memory_space<vmem>>) attributes {dimension_semantics = [#tpu.dimension_semantics<parallel>, #tpu.dimension_semantics<parallel>, #tpu.dimension_semantics<arbitrary>], iteration_bounds = array<i64: 2, 1, 1>, scalar_prefetch = 0 : i64, scratch_operands = 2 : i64, tpu.core_type = #tpu.core_type<tc>, window_params = [{pipeline_mode = #tpu.pipeline_mode<synchronous>, transform_indices = @transform_0, window_bounds = array<i64: 128, 128>}, {transform_indices = @transform_1, window_bounds = array<i64: 1, 8, 128>}, {transform_indices = @transform_2, window_bounds = array<i64: 1, 8, 128>}, {transform_indices = @transform_3, window_bounds = array<i64: 1, 1, 128, 128>}, {transform_indices = @transform_4, window_bounds = array<i64: 1, 1, 1, 128>}]} {
    %c0_i32 = arith.constant 0 : i32
    %0 = arith.cmpi eq, %arg2, %c0_i32 : i32
    %1 = arith.extui %0 : i1 to i32
    %c0_i32_0 = arith.constant 0 : i32
    %2 = arith.cmpi ne, %1, %c0_i32_0 : i32
    scf.if %2 {
      %cst_19 = arith.constant 0.000000e+00 : f32
      %25 = vector.broadcast %cst_19 : f32 to vector<128x128xf32>
      %c0_20 = arith.constant 0 : index
      %c0_21 = arith.constant 0 : index
      %26 = vector.load %arg8[%c0_20, %c0_21] : memref<128x128xf32, #tpu.memory_space<vmem>>, vector<128x128xf32>
      tpu.vector_store %arg8[%c0_20, %c0_21], %25 {strides = array<i32>} : memref<128x128xf32, #tpu.memory_space<vmem>>, vector<128x128xf32>,
      %cst_22 = arith.constant 0.000000e+00 : f32
      %27 = vector.broadcast %cst_22 : f32 to vector<1x128xf32>
      %c0_23 = arith.constant 0 : index
      %c0_24 = arith.constant 0 : index
      %28 = vector.load %arg9[%c0_23, %c0_24] : memref<1x128xf32, #tpu.memory_space<vmem>>, vector<1x128xf32>
      tpu.vector_store %arg9[%c0_23, %c0_24], %27 {strides = array<i32>} : memref<1x128xf32, #tpu.memory_space<vmem>>, vector<1x128xf32>,
    } else {
    }
    %c0 = arith.constant 0 : index
    %c0_1 = arith.constant 0 : index
    %c0_2 = arith.constant 0 : index
    %3 = vector.load %arg4[%c0, %c0_1, %c0_2] : memref<1x8x128xf32, #tpu.memory_space<vmem>>, vector<1x8x128xf32>
    %4 = vector.shape_cast %3 : vector<1x8x128xf32> to vector<8x128xf32>
    %cst = arith.constant 0.000000e+00 : f32
    %5 = vector.broadcast %cst : f32 to vector<8x128xf32>
    %6 = arith.cmpf ogt, %4, %5 : vector<8x128xf32>
    %cst_3 = arith.constant 1.000000e+00 : f32
    %7 = vector.broadcast %cst_3 : f32 to vector<8x128xf32>
    %8 = arith.addf %4, %7 : vector<8x128xf32>
    %9 = math.exp %4 : vector<8x128xf32>
    %10 = arith.select %6, %8, %9 : vector<8x128xi1>, vector<8x128xf32>
    %c0_4 = arith.constant 0 : index
    %c0_5 = arith.constant 0 : index
    %c0_6 = arith.constant 0 : index
    %11 = vector.load %arg5[%c0_4, %c0_5, %c0_6] : memref<1x8x128xf32, #tpu.memory_space<vmem>>, vector<1x8x128xf32>
    %12 = vector.shape_cast %11 : vector<1x8x128xf32> to vector<8x128xf32>
    %c0_7 = arith.constant 0 : index
    %c0_8 = arith.constant 0 : index
    %13 = vector.load %arg8[%c0_7, %c0_8] : memref<128x128xf32, #tpu.memory_space<vmem>>, vector<128x128xf32>
    %cst_9 = arith.constant dense<0.000000e+00> : vector<128x128xf32>
    %14 = tpu.matmul %10, %12, %cst_9 {dimension_numbers = #tpu.dot_dimension_numbers<[0], [0], [1], [1], [0, 1, 1, 1], [], []>} : vector<8x128xf32>, vector<8x128xf32>, vector<128x128xf32> -> vector<128x128xf32>
    %15 = arith.addf %13, %14 : vector<128x128xf32>
    %c0_10 = arith.constant 0 : index
    %c0_11 = arith.constant 0 : index
    %16 = vector.load %arg8[%c0_10, %c0_11] : memref<128x128xf32, #tpu.memory_space<vmem>>, vector<128x128xf32>
    tpu.vector_store %arg8[%c0_10, %c0_11], %15 {strides = array<i32>} : memref<128x128xf32, #tpu.memory_space<vmem>>, vector<128x128xf32>,
    %c0_12 = arith.constant 0 : index
    %c0_13 = arith.constant 0 : index
    %17 = vector.load %arg9[%c0_12, %c0_13] : memref<1x128xf32, #tpu.memory_space<vmem>>, vector<1x128xf32>
    %cst_14 = arith.constant dense<0.000000e+00> : vector<128xf32>
    %18 = vector.multi_reduction <add>, %10, %cst_14 [0] : vector<8x128xf32> to vector<128xf32>
    %19 = vector.shape_cast %18 : vector<128xf32> to vector<1x128xf32>
    %20 = arith.addf %17, %19 : vector<1x128xf32>
    %c0_15 = arith.constant 0 : index
    %c0_16 = arith.constant 0 : index
    %21 = vector.load %arg9[%c0_15, %c0_16] : memref<1x128xf32, #tpu.memory_space<vmem>>, vector<1x128xf32>
    tpu.vector_store %arg9[%c0_15, %c0_16], %20 {strides = array<i32>} : memref<1x128xf32, #tpu.memory_space<vmem>>, vector<1x128xf32>,
    %c0_i32_17 = arith.constant 0 : i32
    %22 = arith.cmpi eq, %arg2, %c0_i32_17 : i32
    %23 = arith.extui %22 : i1 to i32
    %c0_i32_18 = arith.constant 0 : i32
    %24 = arith.cmpi ne, %23, %c0_i32_18 : i32
    scf.if %24 {
      %c0_19 = arith.constant 0 : index
      %c0_20 = arith.constant 0 : index
      %25 = vector.load %arg8[%c0_19, %c0_20] : memref<128x128xf32, #tpu.memory_space<vmem>>, vector<128x128xf32>
      %c0_21 = arith.constant 0 : index
      %c0_22 = arith.constant 0 : index
      %26 = vector.load %arg3[%c0_21, %c0_22] : memref<128x128xf32, #tpu.memory_space<vmem>>, vector<128x128xf32>
      %27 = arith.mulf %25, %26 : vector<128x128xf32>
      %c0_23 = arith.constant 0 : index
      %c0_24 = arith.constant 0 : index
      %c0_25 = arith.constant 0 : index
      %c0_26 = arith.constant 0 : index
      %28 = vector.load %arg6[%c0_23, %c0_24, %c0_25, %c0_26] : memref<1x1x128x128xf32, #tpu.memory_space<vmem>>, vector<1x1x128x128xf32>
      %29 = vector.shape_cast %28 : vector<1x1x128x128xf32> to vector<128x128xf32>
      %30 = vector.shape_cast %27 : vector<128x128xf32> to vector<1x1x128x128xf32>
      tpu.vector_store %arg6[%c0_23, %c0_24, %c0_25, %c0_26], %30 {strides = array<i32>} : memref<1x1x128x128xf32, #tpu.memory_space<vmem>>, vector<1x1x128x128xf32>,
      %c0_27 = arith.constant 0 : index
      %c0_28 = arith.constant 0 : index
      %31 = vector.load %arg9[%c0_27, %c0_28] : memref<1x128xf32, #tpu.memory_space<vmem>>, vector<1x128xf32>
      %c0_29 = arith.constant 0 : index
      %c0_30 = arith.constant 0 : index
      %c0_31 = arith.constant 0 : index
      %c0_32 = arith.constant 0 : index
      %32 = vector.load %arg7[%c0_29, %c0_30, %c0_31, %c0_32] : memref<1x1x1x128xf32, #tpu.memory_space<vmem>>, vector<1x1x1x128xf32>
      %33 = vector.shape_cast %32 : vector<1x1x1x128xf32> to vector<1x128xf32>
      %34 = vector.shape_cast %31 : vector<1x128xf32> to vector<1x1x1x128xf32>
      tpu.vector_store %arg7[%c0_29, %c0_30, %c0_31, %c0_32], %34 {strides = array<i32>} : memref<1x1x1x128xf32, #tpu.memory_space<vmem>>, vector<1x1x1x128xf32>,
    } else {
    }
    return
  }
  func.func @transform_0(%arg0: i32, %arg1: i32, %arg2: i32) -> (i32, i32) {
    %c0_i32 = arith.constant 0 : i32
    %c0_i32_0 = arith.constant 0 : i32
    %c0_i32_1 = arith.constant 0 : i32
    return %c0_i32, %c0_i32_0 : i32, i32
  }
  func.func @transform_1(%arg0: i32, %arg1: i32, %arg2: i32) -> (i32, i32, i32) {
    %c0_i32 = arith.constant 0 : i32
    return %arg0, %arg2, %arg1 : i32, i32, i32
  }
  func.func @transform_2(%arg0: i32, %arg1: i32, %arg2: i32) -> (i32, i32, i32) {
    %c0_i32 = arith.constant 0 : i32
    return %arg0, %arg2, %arg1 : i32, i32, i32
  }
  func.func @transform_3(%arg0: i32, %arg1: i32, %arg2: i32) -> (i32, i32, i32, i32) {
    %c0_i32 = arith.constant 0 : i32
    %c0_i32_0 = arith.constant 0 : i32
    %c0_i32_1 = arith.constant 0 : i32
    return %arg0, %arg1, %c0_i32, %c0_i32_0 : i32, i32, i32, i32
  }
  func.func @transform_4(%arg0: i32, %arg1: i32, %arg2: i32) -> (i32, i32, i32, i32) {
    %c0_i32 = arith.constant 0 : i32
    %c0_i32_0 = arith.constant 0 : i32
    %c0_i32_1 = arith.constant 0 : i32
    return %arg0, %arg1, %c0_i32, %c0_i32_0 : i32, i32, i32, i32
  }
}

</mosaic_0001>

<llo_original>
// kernel: tpu_custom_call.1
$region0: #{tpu_custom_call.1}
  #allocation0 [shape = 'u32[]', space=smem, size = 0x4, offset = 0x4, fixed_abs, tag = 'smem constant byte address 0x4 - core index']
  #allocation1 [shape = 'u32[144,128]{1,0:T(1,128)}', space=vmem, size = 0x12000, scoped, tag = 'internal scratch']
  #allocation2 [shape = 'f32[128,128]{1,0:T(8,128)}', space=vmem, size = 0x10000, scoped, tag = 'scratch operand']
  #allocation3 [shape = 'f32[1,128]{1,0:T(1,128)}', space=vmem, size = 0x200, scoped, tag = 'scratch operand']
  %s0 = inlined_call_operand.hbm [shape: f32[128,128], index: 0, kind: input, shape index: {}]
  %s1 = inlined_call_operand.hbm [shape: f32[2,8,128], index: 1, kind: input, shape index: {}]
  %s2 = inlined_call_operand.hbm [shape: f32[2,8,128], index: 2, kind: input, shape index: {}]
  %s3 = inlined_call_operand.hbm [shape: f32[2,1,128,128], index: 3, kind: output, shape index: {0}]
  %s4 = inlined_call_operand.hbm [shape: f32[2,1,1,128], index: 4, kind: output, shape index: {1}]
  %5 = xla_tuple %s3, %s4
  %s6 = sld [smem:[#allocation0]]
  $region73: #{tpu_custom_call.1} parent=0
    _
  %s8 = ssub.s32 1, %s6
  %s9 = scalar_select 0, %s8, %s6
  $region1: #{tpu_custom_call.1} parent=0
    #allocation4 [shape = 'u8[65536]{0}', space=vmem, size = 0x10000, scoped, tag = 'input window, operand 0, single buffered']
    #allocation5 [shape = 's32[2]{0}', space=sflag, size = 0x8, scoped, tag = 'scoped memory for tpu_custom_call.1']
    #allocation6 [shape = 's32[2]{0}', space=sflag, size = 0x8, scoped, tag = 'scoped memory for tpu_custom_call.1']
    #allocation7 [shape = 'u8[8192]{0}', space=vmem, size = 0x2000, scoped, tag = 'input window, operand 1']
    #allocation8 [shape = 's32[2]{0}', space=sflag, size = 0x8, scoped, tag = 'scoped memory for tpu_custom_call.1']
    #allocation9 [shape = 'u8[8192]{0}', space=vmem, size = 0x2000, scoped, tag = 'input window, operand 2']
    #allocation10 [shape = 'u8[131072]{0}', space=vmem, size = 0x20000, scoped, tag = 'output window, operand 0']
    #allocation11 [shape = 'u8[1024]{0}', space=vmem, size = 0x400, scoped, tag = 'output window, operand 1']
    #allocation12 [shape = 's32[2]{0}', space=sflag, size = 0x8, scoped, tag = 'scoped memory for tpu_custom_call.1']
    %10 = vsyncpa [#allocation5], 0
    %11 = vsyncpa [#allocation8], 0
    %s12 = scalar_lea.sflag [#allocation8], 1
    %13 = vsyncpa %s12, 0
    %14 = vsyncpa [#allocation6], 0
    %s15 = scalar_lea.sflag [#allocation6], 1
    %16 = vsyncpa %s15, 0
    %17 = vsyncpa [#allocation12], 0
    %s18 = scalar_lea.sflag [#allocation12], 1
    %19 = vsyncpa %s18, 0
    loop: start=0, step=1, limit=4
    $region2: #{tpu_custom_call.1} parent=1 // loop_pre_header
      _
    $region3: #{tpu_custom_call.1} parent=1 // loop_header
      %s21 = sphi 0, %s25
      %p22 = scmp.ge.s32.totalorder %s21, 4
      %s28 = sphi 0, %s47
      %s29 = sphi 0, %s43
      %s30 = sphi 0, %s39
      %s31 = sphi 0, %s28
      %s32 = sphi 0, %s29
      %s33 = sphi 0, %s30
      %s34 = sphi 0, %s31
      %s35 = sphi 0, %s32
      %s36 = sphi 0, %s33
      %s48 = sphi 0, %s48
      %s50 = sphi 0, %s48
      %s51 = sphi 0, %s50
      %s65 = sphi 0, %s51
      %s75 = sphi 0, %s77
      %s78 = sphi 0, %s75
      %s79 = sphi 0, %s78
      %s95 = sphi 0, %s79
      %s105 = sphi 0, %s107
      %s108 = sphi 0, %s105
      %s109 = sphi 0, %s108
      %s125 = sphi 0, %s109
      %s133 = sphi 0, %s135
      %s136 = sphi 0, %s133
      %s137 = sphi 0, %s136
      %s153 = sphi 0, %s137
      %s161 = sphi 0, %s163
      %s164 = sphi 0, %s161
      %s165 = sphi 0, %s164
      %s181 = sphi 0, %s165
    $region4: #{tpu_custom_call.1} parent=1 // loop_header_branch
      %24 = sbr.rel (%p22) target = $region8
    $region5: #{tpu_custom_call.1} parent=1 // loop_body
      %s26 = ssub.s32 %s21, 1
      %s27 = ssub.s32 %s21, 2
      %s37 = sadd.s32 1, %s30
      %p38 = scmp.ge.s32.totalorder %s37, 1
      %s39 = scalar_select %p38, 0, %s37
      %s40 = sadd.s32 1, %s29
      %s41 = scalar_select %p38, %s40, %s29
      %p42 = scmp.ge.s32.totalorder %s41, 1
      %s43 = scalar_select %p42, 0, %s41
      %s44 = sadd.s32 1, %s28
      %s45 = scalar_select %p42, %s44, %s28
      %p46 = scmp.ge.s32.totalorder %s45, 2
      %s47 = scalar_select %p46, 0, %s45
      %s49 = sadd.s32 %s48, 1
      %p52 = scmp.eq.s32.totalorder %s21, 1
      %p53 = scmp.ne.s32.totalorder %s48, %s50
      %p54 = scmp.eq.s32.totalorder %s21, 0
      %p55 = por %p53, %p54
      %p56 = scmp.ne.s32.totalorder %s48, %s50
      %p57 = scmp.eq.s32.totalorder %s26, 1
      %p58 = por %p56, %p57
      %p59 = scmp.ne.s32.totalorder %s50, %s51
      %p60 = scmp.eq.s32.totalorder %s26, 0
      %p61 = por %p59, %p60
      %p62 = scmp.ne.s32.totalorder %s50, %s51
      %p63 = scmp.eq.s32.totalorder %s27, 1
      %p64 = por %p62, %p63
      %p66 = scmp.ne.s32.totalorder %s51, %s65
      %p67 = scmp.eq.s32.totalorder %s27, 0
      %p68 = por %p66, %p67
      %s69 = ssub.s32 %s28, %s47
      %s70 = ssub.s32 %s30, %s39
      %s71 = sor.u32 %s69, %s70
      %s72 = ssub.s32 %s29, %s43
      %s73 = sor.u32 %s71, %s72
      %p74 = scmp.eq.s32.totalorder %s73, 0
      %s76 = sadd.s32 %s75, 1
      %s77 = scalar_select %p74, %s75, %s76
      %p80 = pneg %p74
      %p81 = scmp.eq.s32.totalorder %s21, 1
      %p82 = por %p80, %p81
      %p83 = scmp.ne.s32.totalorder %s75, %s78
      %p84 = scmp.eq.s32.totalorder %s21, 0
      %p85 = por %p83, %p84
      %p86 = scmp.ne.s32.totalorder %s75, %s78
      %p87 = scmp.eq.s32.totalorder %s26, 1
      %p88 = por %p86, %p87
      %p89 = scmp.ne.s32.totalorder %s78, %s79
      %p90 = scmp.eq.s32.totalorder %s26, 0
      %p91 = por %p89, %p90
      %p92 = scmp.ne.s32.totalorder %s78, %s79
      %p93 = scmp.eq.s32.totalorder %s27, 1
      %p94 = por %p92, %p93
      %p96 = scmp.ne.s32.totalorder %s79, %s95
      %p97 = scmp.eq.s32.totalorder %s27, 0
      %p98 = por %p96, %p97
      %s99 = ssub.s32 %s28, %s47
      %s100 = ssub.s32 %s30, %s39
      %s101 = sor.u32 %s99, %s100
      %s102 = ssub.s32 %s29, %s43
      %s103 = sor.u32 %s101, %s102
      %p104 = scmp.eq.s32.totalorder %s103, 0
      %s106 = sadd.s32 %s105, 1
      %s107 = scalar_select %p104, %s105, %s106
      %p110 = pneg %p104
      %p111 = scmp.eq.s32.totalorder %s21, 1
      %p112 = por %p110, %p111
      %p113 = scmp.ne.s32.totalorder %s105, %s108
      %p114 = scmp.eq.s32.totalorder %s21, 0
      %p115 = por %p113, %p114
      %p116 = scmp.ne.s32.totalorder %s105, %s108
      %p117 = scmp.eq.s32.totalorder %s26, 1
      %p118 = por %p116, %p117
      %p119 = scmp.ne.s32.totalorder %s108, %s109
      %p120 = scmp.eq.s32.totalorder %s26, 0
      %p121 = por %p119, %p120
      %p122 = scmp.ne.s32.totalorder %s108, %s109
      %p123 = scmp.eq.s32.totalorder %s27, 1
      %p124 = por %p122, %p123
      %p126 = scmp.ne.s32.totalorder %s109, %s125
      %p127 = scmp.eq.s32.totalorder %s27, 0
      %p128 = por %p126, %p127
      %s129 = ssub.s32 %s28, %s47
      %s130 = ssub.s32 %s29, %s43
      %s131 = sor.u32 %s129, %s130
      %p132 = scmp.eq.s32.totalorder %s131, 0
      %s134 = sadd.s32 %s133, 1
      %s135 = scalar_select %p132, %s133, %s134
      %p138 = pneg %p132
      %p139 = scmp.eq.s32.totalorder %s21, 1
      %p140 = por %p138, %p139
      %p141 = scmp.ne.s32.totalorder %s133, %s136
      %p142 = scmp.eq.s32.totalorder %s21, 0
      %p143 = por %p141, %p142
      %p144 = scmp.ne.s32.totalorder %s133, %s136
      %p145 = scmp.eq.s32.totalorder %s26, 1
      %p146 = por %p144, %p145
      %p147 = scmp.ne.s32.totalorder %s136, %s137
      %p148 = scmp.eq.s32.totalorder %s26, 0
      %p149 = por %p147, %p148
      %p150 = scmp.ne.s32.totalorder %s136, %s137
      %p151 = scmp.eq.s32.totalorder %s27, 1
      %p152 = por %p150, %p151
      %p154 = scmp.ne.s32.totalorder %s137, %s153
      %p155 = scmp.eq.s32.totalorder %s27, 0
      %p156 = por %p154, %p155
      %s157 = ssub.s32 %s28, %s47
      %s158 = ssub.s32 %s29, %s43
      %s159 = sor.u32 %s157, %s158
      %p160 = scmp.eq.s32.totalorder %s159, 0
      %s162 = sadd.s32 %s161, 1
      %s163 = scalar_select %p160, %s161, %s162
      %p166 = pneg %p160
      %p167 = scmp.eq.s32.totalorder %s21, 1
      %p168 = por %p166, %p167
      %p169 = scmp.ne.s32.totalorder %s161, %s164
      %p170 = scmp.eq.s32.totalorder %s21, 0
      %p171 = por %p169, %p170
      %p172 = scmp.ne.s32.totalorder %s161, %s164
      %p173 = scmp.eq.s32.totalorder %s26, 1
      %p174 = por %p172, %p173
      %p175 = scmp.ne.s32.totalorder %s164, %s165
      %p176 = scmp.eq.s32.totalorder %s26, 0
      %p177 = por %p175, %p176
      %p178 = scmp.ne.s32.totalorder %s164, %s165
      %p179 = scmp.eq.s32.totalorder %s27, 1
      %p180 = por %p178, %p179
      %p182 = scmp.ne.s32.totalorder %s165, %s181
      %p183 = scmp.eq.s32.totalorder %s27, 0
      %p184 = por %p182, %p183
      %p185 = scmp.le.s32.totalorder 1, %s21
      %p186 = scmp.lt.s32.totalorder %s21, 3
      %p187 = pnand %p185, %p186
      %p188 = pneg %p187
      // Predicated region
      $region9: #{tpu_custom_call.1} parent=5 // pred_check
        _
      $region10: #{tpu_custom_call.1} parent=5 // pred_check_branch
        %190 = sbr.rel (%p187) target = $region12
      $region11: #{tpu_custom_call.1} parent=5 // pred_region
        %s191 = ssub.s32 %s21, 1
        // Predicated region
        $region13: #{tpu_custom_call.1} parent=11 // pred_check
          %p192 = pneg %p61
        $region14: #{tpu_custom_call.1} parent=11 // pred_check_branch
          %194 = sbr.rel (%p192) target = $region16
        $region15: #{tpu_custom_call.1} parent=11 // pred_region
          %s196 = ssub.s32 2048, 2048
          %197 = vsyncadd [#allocation5], %s196
          %s198 = sshll.u32 [#allocation4], 4
          %s199 = int_to_ptr.vmem [resolvable:$true] %s198
          %204 = dma.hbm_to_vmem [thread:$0]  %s0, 2048, %s199, [#allocation5], 128, 128, 8
        $region16: #{tpu_custom_call.1} parent=11 // pred_fallthru
          _
      $region12: #{tpu_custom_call.1} parent=5 // pred_fallthru
        _
      %p205 = scmp.lt.s32.totalorder %s21, 2
      // Predicated region
      $region17: #{tpu_custom_call.1} parent=5 // pred_check
        %p206 = pneg %p205
      $region18: #{tpu_custom_call.1} parent=5 // pred_check_branch
        %208 = sbr.rel (%p206) target = $region20
      $region19: #{tpu_custom_call.1} parent=5 // pred_region
        // Predicated region
        $region21: #{tpu_custom_call.1} parent=19 // pred_check
          %p209 = pneg %p85
        $region22: #{tpu_custom_call.1} parent=19 // pred_check_branch
          %211 = sbr.rel (%p209) target = $region24
        $region23: #{tpu_custom_call.1} parent=19 // pred_region
          %s212 = sand.u32 %s21, 1
          %s213 = scalar_lea.sflag [#allocation8], %s212
          %s214 = sand.u32 %s75, 1
          %s215 = smul.addr %s214, 8
          %s216 = scalar_lea.vmem [#allocation7], %s215
          %s218 = ssub.s32 128, 128
          %219 = vsyncadd %s213, %s218
          %s220 = sadd.s32 %s29, %s30
          %s221 = sadd.s32 %s220, %s28
          %s222 = smul.addr %s221, 128
          %s223 = scalar_lea.hbm %s1, %s222
          %s225 = sshll.u32 %s216, 4
          %s226 = int_to_ptr.vmem [resolvable:$true] %s225
          %228 = dma.hbm_to_vmem [thread:$0]  %s223, 128, %s226, %s213
        $region24: #{tpu_custom_call.1} parent=19 // pred_fallthru
          _
        // Predicated region
        $region25: #{tpu_custom_call.1} parent=19 // pred_check
          %p229 = pneg %p115
        $region26: #{tpu_custom_call.1} parent=19 // pred_check_branch
          %231 = sbr.rel (%p229) target = $region28
        $region27: #{tpu_custom_call.1} parent=19 // pred_region
          %s232 = sand.u32 %s21, 1
          %s233 = scalar_lea.sflag [#allocation8], %s232
          %s234 = sand.u32 %s105, 1
          %s235 = smul.addr %s234, 8
          %s236 = scalar_lea.vmem [#allocation9], %s235
          %s238 = ssub.s32 128, 128
          %239 = vsyncadd %s233, %s238
          %s240 = sadd.s32 %s29, %s30
          %s241 = sadd.s32 %s240, %s28
          %s242 = smul.addr %s241, 128
          %s243 = scalar_lea.hbm %s2, %s242
          %s245 = sshll.u32 %s236, 4
          %s246 = int_to_ptr.vmem [resolvable:$true] %s245
          %248 = dma.hbm_to_vmem [thread:$0]  %s243, 128, %s246, %s233
        $region28: #{tpu_custom_call.1} parent=19 // pred_fallthru
          _
      $region20: #{tpu_custom_call.1} parent=5 // pred_fallthru
        _
      %p249 = scmp.le.s32.totalorder 1, %s21
      %p250 = scmp.lt.s32.totalorder %s21, 3
      %p251 = pnand %p249, %p250
      %p252 = pneg %p251
      // Predicated region
      $region29: #{tpu_custom_call.1} parent=5 // pred_check
        _
      $region30: #{tpu_custom_call.1} parent=5 // pred_check_branch
        %254 = sbr.rel (%p251) target = $region32
      $region31: #{tpu_custom_call.1} parent=5 // pred_region
        %s255 = ssub.s32 %s21, 1
        // Predicated region
        $region33: #{tpu_custom_call.1} parent=31 // pred_check
          %p256 = pneg %p61
        $region34: #{tpu_custom_call.1} parent=31 // pred_check_branch
          %258 = sbr.rel (%p256) target = $region36
        $region35: #{tpu_custom_call.1} parent=31 // pred_region
          %259 = dma.done [#allocation5], 2048
        $region36: #{tpu_custom_call.1} parent=31 // pred_fallthru
          _
        %s260 = sand.u32 %s26, 1
        %s261 = scalar_lea.sflag [#allocation8], %s260
        %s262 = sand.u32 %s78, 1
        %s263 = smul.addr %s262, 8
        %s264 = scalar_lea.vmem [#allocation7], %s263
        // Predicated region
        $region37: #{tpu_custom_call.1} parent=31 // pred_check
          %p265 = pneg %p91
        $region38: #{tpu_custom_call.1} parent=31 // pred_check_branch
          %267 = sbr.rel (%p265) target = $region40
        $region39: #{tpu_custom_call.1} parent=31 // pred_region
          %268 = dma.done %s261, 128
        $region40: #{tpu_custom_call.1} parent=31 // pred_fallthru
          _
        %s269 = sand.u32 %s26, 1
        %s270 = scalar_lea.sflag [#allocation8], %s269
        %s271 = sand.u32 %s108, 1
        %s272 = smul.addr %s271, 8
        %s273 = scalar_lea.vmem [#allocation9], %s272
        // Predicated region
        $region41: #{tpu_custom_call.1} parent=31 // pred_check
          %p274 = pneg %p121
        $region42: #{tpu_custom_call.1} parent=31 // pred_check_branch
          %276 = sbr.rel (%p274) target = $region44
        $region43: #{tpu_custom_call.1} parent=31 // pred_region
          %277 = dma.done %s270, 128
        $region44: #{tpu_custom_call.1} parent=31 // pred_fallthru
          _
        %p278 = pneg %p61
        %p279 = pneg %p58
        %s280 = sand.u32 %s26, 1
        %s281 = scalar_lea.sflag [#allocation8], %s280
        %s282 = sand.u32 %s78, 1
        %s283 = smul.addr %s282, 8
        %s284 = scalar_lea.vmem [#allocation7], %s283
        %p285 = pneg %p91
        %p286 = pneg %p88
        %s287 = sand.u32 %s26, 1
        %s288 = scalar_lea.sflag [#allocation8], %s287
        %s289 = sand.u32 %s108, 1
        %s290 = smul.addr %s289, 8
        %s291 = scalar_lea.vmem [#allocation9], %s290
        %p292 = pneg %p121
        %p293 = pneg %p118
        %p294 = pneg %p149
        %p295 = pneg %p146
        %s296 = sand.u32 %s136, 1
        %s297 = scalar_lea.sflag [#allocation6], %s296
        %s298 = sand.u32 %s136, 1
        %s299 = smul.addr %s298, 128
        %s300 = scalar_lea.vmem [#allocation10], %s299
        %p301 = pneg %p177
        %p302 = pneg %p174
        %s303 = sand.u32 %s164, 1
        %s304 = scalar_lea.sflag [#allocation12], %s303
        %s305 = sand.u32 %s164, 1
        %s306 = scalar_lea.vmem [#allocation11], %s305
        %p307 = scmp.eq.s32.totalorder %s33, 0
        // Predicated region
        $region45: #{tpu_custom_call.1} parent=31 // pred_check
          %p308 = pneg %p307
        $region46: #{tpu_custom_call.1} parent=31 // pred_check_branch
          %310 = sbr.rel (%p308) target = $region48
        $region47: #{tpu_custom_call.1} parent=31 // pred_region
          %311 = vst [vmem:[#allocation2] sm:$0xff] 0.0
          %312 = vst [vmem:[#allocation2 + $0x8] sm:$0xff] 0.0
          %313 = vst [vmem:[#allocation2 + $0x10] sm:$0xff] 0.0
          %314 = vst [vmem:[#allocation2 + $0x18] sm:$0xff] 0.0
          %315 = vst [vmem:[#allocation2 + $0x20] sm:$0xff] 0.0
          %316 = vst [vmem:[#allocation2 + $0x28] sm:$0xff] 0.0
          %317 = vst [vmem:[#allocation2 + $0x30] sm:$0xff] 0.0
          %318 = vst [vmem:[#allocation2 + $0x38] sm:$0xff] 0.0
          %319 = vst [vmem:[#allocation2 + $0x40] sm:$0xff] 0.0
          %320 = vst [vmem:[#allocation2 + $0x48] sm:$0xff] 0.0
          %321 = vst [vmem:[#allocation2 + $0x50] sm:$0xff] 0.0
          %322 = vst [vmem:[#allocation2 + $0x58] sm:$0xff] 0.0
          %323 = vst [vmem:[#allocation2 + $0x60] sm:$0xff] 0.0
          %324 = vst [vmem:[#allocation2 + $0x68] sm:$0xff] 0.0
          %325 = vst [vmem:[#allocation2 + $0x70] sm:$0xff] 0.0
          %326 = vst [vmem:[#allocation2 + $0x78] sm:$0xff] 0.0
          %327 = vst [vmem:[#allocation3] sm:$0x1] 0.0
        $region48: #{tpu_custom_call.1} parent=31 // pred_fallthru
          _
        %v328 = vld [vmem:[%s264] sm:$0xff]
        %vm329 = vcmp.gt.f32.partialorder %v328, 0.0
        %v330 = vadd.f32 %v328, 1.0
        %v331 = vmul.f32 %v328, 1.442695
        %v332 = vpow.pop %v331
        %v333 = vsel %vm329, %v330, %v332
        %v334 = vld [vmem:[%s273] sm:$0xff]
        %v335 = vld [vmem:[#allocation2] sm:$0xff]
        %v336 = vld [vmem:[#allocation2 + $0x8] sm:$0xff]
        %v337 = vld [vmem:[#allocation2 + $0x10] sm:$0xff]
        %v338 = vld [vmem:[#allocation2 + $0x18] sm:$0xff]
        %v339 = vld [vmem:[#allocation2 + $0x20] sm:$0xff]
        %v340 = vld [vmem:[#allocation2 + $0x28] sm:$0xff]
        %v341 = vld [vmem:[#allocation2 + $0x30] sm:$0xff]
        %v342 = vld [vmem:[#allocation2 + $0x38] sm:$0xff]
        %v343 = vld [vmem:[#allocation2 + $0x40] sm:$0xff]
        %v344 = vld [vmem:[#allocation2 + $0x48] sm:$0xff]
        %v345 = vld [vmem:[#allocation2 + $0x50] sm:$0xff]
        %v346 = vld [vmem:[#allocation2 + $0x58] sm:$0xff]
        %v347 = vld [vmem:[#allocation2 + $0x60] sm:$0xff]
        %v348 = vld [vmem:[#allocation2 + $0x68] sm:$0xff]
        %v349 = vld [vmem:[#allocation2 + $0x70] sm:$0xff]
        %v350 = vld [vmem:[#allocation2 + $0x78] sm:$0xff]
        %351 = vxpose.xlu0.b32.start [1/16] %v333, 128
        %352 = vxpose.xlu0.b32.cont [2/16] 0.0, 128
        %353 = vxpose.xlu0.b32.cont [3/16] 0.0, 128
        %354 = vxpose.xlu0.b32.cont [4/16] 0.0, 128
        %355 = vxpose.xlu0.b32.cont [5/16] 0.0, 128
        %356 = vxpose.xlu0.b32.cont [6/16] 0.0, 128
        %357 = vxpose.xlu0.b32.cont [7/16] 0.0, 128
        %358 = vxpose.xlu0.b32.cont [8/16] 0.0, 128
        %359 = vxpose.xlu0.b32.cont [9/16] 0.0, 128
        %360 = vxpose.xlu0.b32.cont [10/16] 0.0, 128
        %361 = vxpose.xlu0.b32.cont [11/16] 0.0, 128
        %362 = vxpose.xlu0.b32.cont [12/16] 0.0, 128
        %363 = vxpose.xlu0.b32.cont [13/16] 0.0, 128
        %364 = vxpose.xlu0.b32.cont [14/16] 0.0, 128
        %365 = vxpose.xlu0.b32.cont [15/16] 0.0, 128
        %366 = vxpose.xlu0.b32.end [16/16] 0.0, 128
        %v367 = vpop.trf.xlu0
        %v368 = vpop.trf.xlu0
        %v369 = vpop.trf.xlu0
        %v370 = vpop.trf.xlu0
        %v371 = vpop.trf.xlu0
        %v372 = vpop.trf.xlu0
        %v373 = vpop.trf.xlu0
        %v374 = vpop.trf.xlu0
        %v375 = vpop.trf.xlu0
        %v376 = vpop.trf.xlu0
        %v377 = vpop.trf.xlu0
        %v378 = vpop.trf.xlu0
        %v379 = vpop.trf.xlu0
        %v380 = vpop.trf.xlu0
        %v381 = vpop.trf.xlu0
        %v382 = vpop.trf.xlu0
        %vm383 = vcmask 64512
        %v385 = vsel %vm383, %v367, 0
        %v388 = vsel %vm383, %v368, 0
        %v391 = vsel %vm383, %v369, 0
        %v394 = vsel %vm383, %v370, 0
        %v397 = vsel %vm383, %v371, 0
        %v400 = vsel %vm383, %v372, 0
        %v403 = vsel %vm383, %v373, 0
        %v406 = vsel %vm383, %v374, 0
        %v409 = vsel %vm383, %v375, 0
        %v412 = vsel %vm383, %v376, 0
        %v415 = vsel %vm383, %v377, 0
        %v418 = vsel %vm383, %v378, 0
        %v421 = vsel %vm383, %v379, 0
        %v424 = vsel %vm383, %v380, 0
        %v427 = vsel %vm383, %v381, 0
        %v430 = vsel %vm383, %v382, 0
        %432 = vmatprep.subr.mxu0 0.0
        %433 = vmatpush1.msra.mxu0 0.0
        %434 = vmatprep.subr.mxu0 0.0
        %435 = vmatpush1.msra.mxu0 0.0
        %436 = vmatprep.subr.mxu0 0.0
        %437 = vmatpush1.msra.mxu0 0.0
        %438 = vmatprep.subr.mxu0 0.0
        %439 = vmatpush1.msra.mxu0 0.0
        %440 = vmatprep.subr.mxu0 0.0
        %441 = vmatpush1.msra.mxu0 0.0
        %442 = vmatprep.subr.mxu0 0.0
        %443 = vmatpush1.msra.mxu0 0.0
        %444 = vmatprep.subr.mxu0 0.0
        %445 = vmatpush1.msra.mxu0 0.0
        %446 = vmatprep.subr.mxu0 0.0
        %447 = vmatpush1.msra.mxu0 0.0
        %448 = vmatprep.subr.mxu0 0.0
        %449 = vmatpush1.msra.mxu0 0.0
        %450 = vmatprep.subr.mxu0 0.0
        %451 = vmatpush1.msra.mxu0 0.0
        %452 = vmatprep.subr.mxu0 0.0
        %453 = vmatpush1.msra.mxu0 0.0
        %454 = vmatprep.subr.mxu0 0.0
        %455 = vmatpush1.msra.mxu0 0.0
        %456 = vmatprep.subr.mxu0 0.0
        %457 = vmatpush1.msra.mxu0 0.0
        %458 = vmatprep.subr.mxu0 0.0
        %459 = vmatpush1.msra.mxu0 0.0
        %460 = vmatprep.subr.mxu0 0.0
        %461 = vmatpush1.msra.mxu0 0.0
        %462 = vmatprep.subr.mxu0 0.0
        %463 = vmatpush1.msra.mxu0 %v334
        %464 = vmatprep.subr.mxu0 0.0
        %465 = vmatpush2.msra.mxu0 0.0
        %466 = vmatprep.subr.mxu0 0.0
        %467 = vmatpush2.msra.mxu0 0.0
        %468 = vmatprep.subr.mxu0 0.0
        %469 = vmatpush2.msra.mxu0 0.0
        %470 = vmatprep.subr.mxu0 0.0
        %471 = vmatpush2.msra.mxu0 0.0
        %472 = vmatprep.subr.mxu0 0.0
        %473 = vmatpush2.msra.mxu0 0.0
        %474 = vmatprep.subr.mxu0 0.0
        %475 = vmatpush2.msra.mxu0 0.0
        %476 = vmatprep.subr.mxu0 0.0
        %477 = vmatpush2.msra.mxu0 0.0
        %478 = vmatprep.subr.mxu0 0.0
        %479 = vmatpush2.msra.mxu0 0.0
        %480 = vmatprep.subr.mxu0 0.0
        %481 = vmatpush2.msra.mxu0 0.0
        %482 = vmatprep.subr.mxu0 0.0
        %483 = vmatpush2.msra.mxu0 0.0
        %484 = vmatprep.subr.mxu0 0.0
        %485 = vmatpush2.msra.mxu0 0.0
        %486 = vmatprep.subr.mxu0 0.0
        %487 = vmatpush2.msra.mxu0 0.0
        %488 = vmatprep.subr.mxu0 0.0
        %489 = vmatpush2.msra.mxu0 0.0
        %490 = vmatprep.subr.mxu0 0.0
        %491 = vmatpush2.msra.mxu0 0.0
        %492 = vmatprep.subr.mxu0 0.0
        %493 = vmatpush2.msra.mxu0 0.0
        %494 = vmatprep.subr.mxu0 0.0
        %495 = vmatpush2.msra.mxu0 0.0
        %496 = vmatprep.mubr.f32.mxu0 0.0
        %497 = vmatmul.mubr.f32.gmra.mxu0 %v385
        %v498 = vpop.f32.mrf.mxu0
        %v499 = vadd.f32 0.0, %v498
        %v500 = vpop.f32.mrf.mxu0
        %501 = vmatprep.mubr.f32.mxu0 0.0
        %502 = vmatmul.mubr.f32.gmra.mxu0 %v388
        %v503 = vpop.f32.mrf.mxu0
        %v504 = vadd.f32 0.0, %v503
        %v505 = vpop.f32.mrf.mxu0
        %506 = vmatprep.mubr.f32.mxu0 0.0
        %507 = vmatmul.mubr.f32.gmra.mxu0 %v391
        %v508 = vpop.f32.mrf.mxu0
        %v509 = vadd.f32 0.0, %v508
        %v510 = vpop.f32.mrf.mxu0
        %511 = vmatprep.mubr.f32.mxu0 0.0
        %512 = vmatmul.mubr.f32.gmra.mxu0 %v394
        %v513 = vpop.f32.mrf.mxu0
        %v514 = vadd.f32 0.0, %v513
        %v515 = vpop.f32.mrf.mxu0
        %516 = vmatprep.mubr.f32.mxu0 0.0
        %517 = vmatmul.mubr.f32.gmra.mxu0 %v397
        %v518 = vpop.f32.mrf.mxu0
        %v519 = vadd.f32 0.0, %v518
        %v520 = vpop.f32.mrf.mxu0
        %521 = vmatprep.mubr.f32.mxu0 0.0
        %522 = vmatmul.mubr.f32.gmra.mxu0 %v400
        %v523 = vpop.f32.mrf.mxu0
        %v524 = vadd.f32 0.0, %v523
        %v525 = vpop.f32.mrf.mxu0
        %526 = vmatprep.mubr.f32.mxu0 0.0
        %527 = vmatmul.mubr.f32.gmra.mxu0 %v403
        %v528 = vpop.f32.mrf.mxu0
        %v529 = vadd.f32 0.0, %v528
        %v530 = vpop.f32.mrf.mxu0
        %531 = vmatprep.mubr.f32.mxu0 0.0
        %532 = vmatmul.mubr.f32.gmra.mxu0 %v406
        %v533 = vpop.f32.mrf.mxu0
        %v534 = vadd.f32 0.0, %v533
        %v535 = vpop.f32.mrf.mxu0
        %536 = vmatprep.mubr.f32.mxu0 0.0
        %537 = vmatmul.mubr.f32.gmra.mxu0 %v409
        %v538 = vpop.f32.mrf.mxu0
        %v539 = vadd.f32 0.0, %v538
        %v540 = vpop.f32.mrf.mxu0
        %541 = vmatprep.mubr.f32.mxu0 0.0
        %542 = vmatmul.mubr.f32.gmra.mxu0 %v412
        %v543 = vpop.f32.mrf.mxu0
        %v544 = vadd.f32 0.0, %v543
        %v545 = vpop.f32.mrf.mxu0
        %546 = vmatprep.mubr.f32.mxu0 0.0
        %547 = vmatmul.mubr.f32.gmra.mxu0 %v415
        %v548 = vpop.f32.mrf.mxu0
        %v549 = vadd.f32 0.0, %v548
        %v550 = vpop.f32.mrf.mxu0
        %551 = vmatprep.mubr.f32.mxu0 0.0
        %552 = vmatmul.mubr.f32.gmra.mxu0 %v418
        %v553 = vpop.f32.mrf.mxu0
        %v554 = vadd.f32 0.0, %v553
        %v555 = vpop.f32.mrf.mxu0
        %556 = vmatprep.mubr.f32.mxu0 0.0
        %557 = vmatmul.mubr.f32.gmra.mxu0 %v421
        %v558 = vpop.f32.mrf.mxu0
        %v559 = vadd.f32 0.0, %v558
        %v560 = vpop.f32.mrf.mxu0
        %561 = vmatprep.mubr.f32.mxu0 0.0
        %562 = vmatmul.mubr.f32.gmra.mxu0 %v424
        %v563 = vpop.f32.mrf.mxu0
        %v564 = vadd.f32 0.0, %v563
        %v565 = vpop.f32.mrf.mxu0
        %566 = vmatprep.mubr.f32.mxu0 0.0
        %567 = vmatmul.mubr.f32.gmra.mxu0 %v427
        %v568 = vpop.f32.mrf.mxu0
        %v569 = vadd.f32 0.0, %v568
        %v570 = vpop.f32.mrf.mxu0
        %571 = vmatprep.mubr.f32.mxu0 0.0
        %572 = vmatmul.mubr.f32.gmra.mxu0 %v430
        %v573 = vpop.f32.mrf.mxu0
        %v574 = vadd.f32 0.0, %v573
        %v575 = vpop.f32.mrf.mxu0
        %576 = vdwg.mxu0
        %v577 = vadd.f32 %v335, %v499
        %v578 = vadd.f32 %v336, %v504
        %v579 = vadd.f32 %v337, %v509
        %v580 = vadd.f32 %v338, %v514
        %v581 = vadd.f32 %v339, %v519
        %v582 = vadd.f32 %v340, %v524
        %v583 = vadd.f32 %v341, %v529
        %v584 = vadd.f32 %v342, %v534
        %v585 = vadd.f32 %v343, %v539
        %v586 = vadd.f32 %v344, %v544
        %v587 = vadd.f32 %v345, %v549
        %v588 = vadd.f32 %v346, %v554
        %v589 = vadd.f32 %v347, %v559
        %v590 = vadd.f32 %v348, %v564
        %v591 = vadd.f32 %v349, %v569
        %v592 = vadd.f32 %v350, %v574
        %593 = vst [vmem:[#allocation2] sm:$0xff] %v577
        %594 = vst [vmem:[#allocation2 + $0x8] sm:$0xff] %v578
        %595 = vst [vmem:[#allocation2 + $0x10] sm:$0xff] %v579
        %596 = vst [vmem:[#allocation2 + $0x18] sm:$0xff] %v580
        %597 = vst [vmem:[#allocation2 + $0x20] sm:$0xff] %v581
        %598 = vst [vmem:[#allocation2 + $0x28] sm:$0xff] %v582
        %599 = vst [vmem:[#allocation2 + $0x30] sm:$0xff] %v583
        %600 = vst [vmem:[#allocation2 + $0x38] sm:$0xff] %v584
        %601 = vst [vmem:[#allocation2 + $0x40] sm:$0xff] %v585
        %602 = vst [vmem:[#allocation2 + $0x48] sm:$0xff] %v586
        %603 = vst [vmem:[#allocation2 + $0x50] sm:$0xff] %v587
        %604 = vst [vmem:[#allocation2 + $0x58] sm:$0xff] %v588
        %605 = vst [vmem:[#allocation2 + $0x60] sm:$0xff] %v589
        %606 = vst [vmem:[#allocation2 + $0x68] sm:$0xff] %v590
        %607 = vst [vmem:[#allocation2 + $0x70] sm:$0xff] %v591
        %608 = vst [vmem:[#allocation2 + $0x78] sm:$0xff] %v592
        %v609 = vld [vmem:[#allocation3] sm:$0x1]
        %v610 = vrot.slane %v333, 4
        %v611 = vadd.f32 %v333, %v610
        %v612 = vrot.slane %v611, 2
        %v613 = vadd.f32 %v611, %v612
        %v614 = vrot.slane %v613, 1
        %v615 = vadd.f32 %v613, %v614
        %v616 = vadd.f32 %v609, %v615
        %617 = vst [vmem:[#allocation3] sm:$0x1] %v616
        // Predicated region
        $region49: #{tpu_custom_call.1} parent=31 // pred_check
          %p618 = pneg %p307
        $region50: #{tpu_custom_call.1} parent=31 // pred_check_branch
          %620 = sbr.rel (%p618) target = $region52
        $region51: #{tpu_custom_call.1} parent=31 // pred_region
          %v621 = vld [vmem:[#allocation2] sm:$0xff]
          %v622 = vld [vmem:[#allocation2 + $0x8] sm:$0xff]
          %v623 = vld [vmem:[#allocation2 + $0x10] sm:$0xff]
          %v624 = vld [vmem:[#allocation2 + $0x18] sm:$0xff]
          %v625 = vld [vmem:[#allocation2 + $0x20] sm:$0xff]
          %v626 = vld [vmem:[#allocation2 + $0x28] sm:$0xff]
          %v627 = vld [vmem:[#allocation2 + $0x30] sm:$0xff]
          %v628 = vld [vmem:[#allocation2 + $0x38] sm:$0xff]
          %v629 = vld [vmem:[#allocation2 + $0x40] sm:$0xff]
          %v630 = vld [vmem:[#allocation2 + $0x48] sm:$0xff]
          %v631 = vld [vmem:[#allocation2 + $0x50] sm:$0xff]
          %v632 = vld [vmem:[#allocation2 + $0x58] sm:$0xff]
          %v633 = vld [vmem:[#allocation2 + $0x60] sm:$0xff]
          %v634 = vld [vmem:[#allocation2 + $0x68] sm:$0xff]
          %v635 = vld [vmem:[#allocation2 + $0x70] sm:$0xff]
          %v636 = vld [vmem:[#allocation2 + $0x78] sm:$0xff]
          %v637 = vld [vmem:[#allocation4] sm:$0xff]
          %v638 = vld [vmem:[#allocation4 + $0x8] sm:$0xff]
          %v639 = vld [vmem:[#allocation4 + $0x10] sm:$0xff]
          %v640 = vld [vmem:[#allocation4 + $0x18] sm:$0xff]
          %v641 = vld [vmem:[#allocation4 + $0x20] sm:$0xff]
          %v642 = vld [vmem:[#allocation4 + $0x28] sm:$0xff]
          %v643 = vld [vmem:[#allocation4 + $0x30] sm:$0xff]
          %v644 = vld [vmem:[#allocation4 + $0x38] sm:$0xff]
          %v645 = vld [vmem:[#allocation4 + $0x40] sm:$0xff]
          %v646 = vld [vmem:[#allocation4 + $0x48] sm:$0xff]
          %v647 = vld [vmem:[#allocation4 + $0x50] sm:$0xff]
          %v648 = vld [vmem:[#allocation4 + $0x58] sm:$0xff]
          %v649 = vld [vmem:[#allocation4 + $0x60] sm:$0xff]
          %v650 = vld [vmem:[#allocation4 + $0x68] sm:$0xff]
          %v651 = vld [vmem:[#allocation4 + $0x70] sm:$0xff]
          %v652 = vld [vmem:[#allocation4 + $0x78] sm:$0xff]
          %v653 = vmul.f32 %v621, %v637
          %v654 = vmul.f32 %v622, %v638
          %v655 = vmul.f32 %v623, %v639
          %v656 = vmul.f32 %v624, %v640
          %v657 = vmul.f32 %v625, %v641
          %v658 = vmul.f32 %v626, %v642
          %v659 = vmul.f32 %v627, %v643
          %v660 = vmul.f32 %v628, %v644
          %v661 = vmul.f32 %v629, %v645
          %v662 = vmul.f32 %v630, %v646
          %v663 = vmul.f32 %v631, %v647
          %v664 = vmul.f32 %v632, %v648
          %v665 = vmul.f32 %v633, %v649
          %v666 = vmul.f32 %v634, %v650
          %v667 = vmul.f32 %v635, %v651
          %v668 = vmul.f32 %v636, %v652
          %669 = vst [vmem:[%s300] sm:$0xff] %v653
          %670 = vst [vmem:[%s300 + $0x8] sm:$0xff] %v654
          %671 = vst [vmem:[%s300 + $0x10] sm:$0xff] %v655
          %672 = vst [vmem:[%s300 + $0x18] sm:$0xff] %v656
          %673 = vst [vmem:[%s300 + $0x20] sm:$0xff] %v657
          %674 = vst [vmem:[%s300 + $0x28] sm:$0xff] %v658
          %675 = vst [vmem:[%s300 + $0x30] sm:$0xff] %v659
          %676 = vst [vmem:[%s300 + $0x38] sm:$0xff] %v660
          %677 = vst [vmem:[%s300 + $0x40] sm:$0xff] %v661
          %678 = vst [vmem:[%s300 + $0x48] sm:$0xff] %v662
          %679 = vst [vmem:[%s300 + $0x50] sm:$0xff] %v663
          %680 = vst [vmem:[%s300 + $0x58] sm:$0xff] %v664
          %681 = vst [vmem:[%s300 + $0x60] sm:$0xff] %v665
          %682 = vst [vmem:[%s300 + $0x68] sm:$0xff] %v666
          %683 = vst [vmem:[%s300 + $0x70] sm:$0xff] %v667
          %684 = vst [vmem:[%s300 + $0x78] sm:$0xff] %v668
          %v685 = vld [vmem:[#allocation3] sm:$0x1]
          %686 = vst [vmem:[%s306] sm:$0x1] %v685
        $region52: #{tpu_custom_call.1} parent=31 // pred_fallthru
          _
        %s687 = sand.u32 %s136, 1
        %s688 = scalar_lea.sflag [#allocation6], %s687
        %s689 = sand.u32 %s136, 1
        %s690 = smul.addr %s689, 128
        %s691 = scalar_lea.vmem [#allocation10], %s690
        %s692 = sand.u32 %s164, 1
        %s693 = scalar_lea.sflag [#allocation12], %s692
        %s694 = sand.u32 %s164, 1
        %s695 = scalar_lea.vmem [#allocation11], %s694
        // Predicated region
        $region53: #{tpu_custom_call.1} parent=31 // pred_check
          %p696 = pneg %p146
        $region54: #{tpu_custom_call.1} parent=31 // pred_check_branch
          %698 = sbr.rel (%p696) target = $region56
        $region55: #{tpu_custom_call.1} parent=31 // pred_region
          %s700 = ssub.s32 2048, 2048
          %701 = vsyncadd %s688, %s700
          %s702 = smul.addr %s32, 16
          %s703 = smul.addr %s31, 16
          %s704 = sadd.s32 %s702, %s703
          %s705 = smul.addr %s704, 128
          %s706 = scalar_lea.hbm %s3, %s705
          %s707 = sshll.u32 %s691, 4
          %s708 = int_to_ptr.vmem [resolvable:$true] %s707
          %713 = dma.vmem_to_hbm [thread:$0]  %s708, 2048, %s706, %s688, 128, 128, 8
        $region56: #{tpu_custom_call.1} parent=31 // pred_fallthru
          _
        // Predicated region
        $region57: #{tpu_custom_call.1} parent=31 // pred_check
          %p714 = pneg %p174
        $region58: #{tpu_custom_call.1} parent=31 // pred_check_branch
          %716 = sbr.rel (%p714) target = $region60
        $region59: #{tpu_custom_call.1} parent=31 // pred_region
          %s718 = ssub.s32 16, 16
          %719 = vsyncadd %s693, %s718
          %s720 = sadd.s32 %s32, %s31
          %s721 = smul.addr %s720, 16
          %s722 = scalar_lea.hbm %s4, %s721
          %s724 = sshll.u32 %s695, 4
          %s725 = int_to_ptr.vmem [resolvable:$true] %s724
          %727 = dma.vmem_to_hbm [thread:$0]  %s725, 16, %s722, %s693
        $region60: #{tpu_custom_call.1} parent=31 // pred_fallthru
          _
      $region32: #{tpu_custom_call.1} parent=5 // pred_fallthru
        _
      %p728 = scmp.le.s32.totalorder 2, %s21
      // Predicated region
      $region61: #{tpu_custom_call.1} parent=5 // pred_check
        %p729 = pneg %p728
      $region62: #{tpu_custom_call.1} parent=5 // pred_check_branch
        %731 = sbr.rel (%p729) target = $region64
      $region63: #{tpu_custom_call.1} parent=5 // pred_region
        %s732 = ssub.s32 %s21, 2
        // Predicated region
        $region65: #{tpu_custom_call.1} parent=63 // pred_check
          %p733 = pneg %p152
        $region66: #{tpu_custom_call.1} parent=63 // pred_check_branch
          %735 = sbr.rel (%p733) target = $region68
        $region67: #{tpu_custom_call.1} parent=63 // pred_region
          %s736 = sand.u32 %s137, 1
          %s737 = scalar_lea.sflag [#allocation6], %s736
          %s738 = sand.u32 %s137, 1
          %s739 = smul.addr %s738, 128
          %s740 = scalar_lea.vmem [#allocation10], %s739
          %741 = dma.done %s737, 2048
        $region68: #{tpu_custom_call.1} parent=63 // pred_fallthru
          _
        // Predicated region
        $region69: #{tpu_custom_call.1} parent=63 // pred_check
          %p742 = pneg %p180
        $region70: #{tpu_custom_call.1} parent=63 // pred_check_branch
          %744 = sbr.rel (%p742) target = $region72
        $region71: #{tpu_custom_call.1} parent=63 // pred_region
          %s745 = sand.u32 %s165, 1
          %s746 = scalar_lea.sflag [#allocation12], %s745
          %s747 = sand.u32 %s165, 1
          %s748 = scalar_lea.vmem [#allocation11], %s747
          %749 = dma.done %s746, 16
        $region72: #{tpu_custom_call.1} parent=63 // pred_fallthru
          _
      $region64: #{tpu_custom_call.1} parent=5 // pred_fallthru
        _
    $region6: #{tpu_custom_call.1} parent=1 // loop_footer
      %s25 = sadd.s32 1, %s21
    $region7: #{tpu_custom_call.1} parent=1 // loop_footer_branch
      %20 = sbr.rel target = $region3
    $region8: #{tpu_custom_call.1} parent=1 // loop_exit
      _
    %750 = vsyncpa [#allocation5], 1
    %s751 = scalar_lea.sflag [#allocation5], 1
    %752 = vsyncpa %s751, 1
    %753 = vsyncpa [#allocation8], 1
    %s754 = scalar_lea.sflag [#allocation8], 1
    %755 = vsyncpa %s754, 1
    %756 = vsyncpa [#allocation6], 1
    %s757 = scalar_lea.sflag [#allocation6], 1
    %758 = vsyncpa %s757, 1
    %759 = vsyncpa [#allocation12], 1
    %s760 = scalar_lea.sflag [#allocation12], 1
    %761 = vsyncpa %s760, 1

</llo_original>
